<compile_context>
chip_gen: v7x
topology: tpu7x:2x2x1
jax: 0.10.0
libtpu: 0.0.40
codegen_flags: <defaults>
</compile_context>

<pallas_src>
import jax
import jax.numpy as jnp
from jax import lax
from jax.experimental import pallas as pl
from jax.experimental.pallas import tpu as pltpu


def _make_outconv_kernel(c_in, c_out, ts, chunk):
    """Kernel body for a (1, C, TS, 128) block, strip-mined in `chunk`-row slabs."""
    n_chunks = ts // chunk

    def compute(x_ref, w_ref, b_ref, o_ref, base):
        # Compute in the input dtype (bf16 stays bf16 on v6e/v7x; f32 stays f32).
        dt = x_ref.dtype
        for o in range(c_out):
            acc = (x_ref[0, 0, pl.ds(base, chunk), :] * w_ref[o, 0].astype(dt)
                   + b_ref[o].astype(dt))
            for c in range(1, c_in):
                acc = acc + x_ref[0, c, pl.ds(base, chunk), :] * w_ref[o, c].astype(dt)
            o_ref[0, o, pl.ds(base, chunk), :] = acc.astype(o_ref.dtype)

    if n_chunks == 1:
        def kernel(x_ref, w_ref, b_ref, o_ref):
            compute(x_ref, w_ref, b_ref, o_ref, 0)
    else:
        def kernel(x_ref, w_ref, b_ref, o_ref):
            def body(i, carry):
                base = pl.multiple_of(i * chunk, chunk)
                compute(x_ref, w_ref, b_ref, o_ref, base)
                return carry
            lax.fori_loop(0, n_chunks, body, 0)

    return kernel


def _pick_row_tile(r_rows, n_batch, c_total, dsize,
                   target_rows=4096, vmem_budget=24 << 20, min_steps=8):
    """Pick TS (rows of 128 lanes per grid step) and the padded total row count.

    - TS is a multiple of 8 (full sublane occupancy) or the full row extent.
    - Double-buffered input+output blocks stay under `vmem_budget` (v7x has
      only 64 MiB physical / 32 MiB default scoped VMEM).
    - Prefer >= `min_steps` total grid steps so both v7x TensorCores get work,
      but never shrink below 256 rows just for step count.
    - Prefer a TS that divides the row count exactly (no padding pass).
    """
    cap = max(8, vmem_budget // (2 * c_total * 128 * dsize))
    ts = max(8, min(target_rows, cap) // 8 * 8)

    if r_rows <= ts:
        if r_rows % 8 != 0 or n_batch >= min_steps or r_rows <= 8:
            # Single full-extent spatial tile per batch (always a legal block).
            return r_rows, r_rows
        ts = min(ts, r_rows)

    # Keep enough grid steps for both v7x TensorCores (parallel semantics).
    while ts > 256 and n_batch * pl.cdiv(r_rows, ts) < min_steps:
        ts = max(8, (ts // 2) // 8 * 8)

    # Prefer a tile that divides the row count exactly (no padding / no copy).
    if r_rows % 8 == 0:
        t = ts
        while t > 8 and r_rows % t != 0:
            t -= 8
        if r_rows % t == 0 and t >= min(ts, 256):
            return t, r_rows

    r_pad = pl.cdiv(r_rows, ts) * ts
    return ts, r_pad


def _pick_chunk(ts, target=64):
    """In-kernel strip-mine size: multiple of 8 dividing TS, ~64 rows (8 f32 vregs)."""
    if ts % 8 != 0 or ts <= target:
        return ts
    c = target
    while c > 8 and ts % c != 0:
        c -= 8
    return c


def outconv_pallas(x4, w2, b1, *, ts):
    """x4: (N, C_in, R, 128), w2: (C_out, C_in) f32, b1: (C_out,) f32 ->
    (N, C_out, R, 128)."""
    N, C_in, R, L = x4.shape
    C_out = w2.shape[0]
    n_sp = R // ts
    chunk = _pick_chunk(ts)
    kernel = _make_outconv_kernel(C_in, C_out, ts, chunk)

    dsize = jnp.dtype(x4.dtype).itemsize
    cost = pl.CostEstimate(
        flops=int(2 * C_in * C_out * N * R * L),
        transcendentals=0,
        bytes_accessed=int((C_in + C_out) * N * R * L * dsize
                           + C_out * C_in * 4 + C_out * 4),
    )

    return pl.pallas_call(
        kernel,
        out_shape=jax.ShapeDtypeStruct((N, C_out, R, L), x4.dtype),
        grid_spec=pltpu.PrefetchScalarGridSpec(
            num_scalar_prefetch=0,
            grid=(N, n_sp),
            in_specs=[
                pl.BlockSpec((1, C_in, ts, L), lambda n, s: (n, 0, s, 0)),
                pl.BlockSpec(memory_space=pltpu.MemorySpace.SMEM),  # weights
                pl.BlockSpec(memory_space=pltpu.MemorySpace.SMEM),  # bias
            ],
            out_specs=pl.BlockSpec((1, C_out, ts, L), lambda n, s: (n, 0, s, 0)),
        ),
        compiler_params=pltpu.CompilerParams(
            dimension_semantics=("parallel", "parallel"),
            vmem_limit_bytes=32 << 20,   # raise v5e's 16 MiB scoped default
        ),
        cost_estimate=cost,
    )(x4, w2, b1)


def out_conv_forward(x_nchw, weight, bias):
    """Equivalent of OutConv.forward (nn.Conv2d with kernel_size=1).

    x_nchw: (N, C_in, H, W)
    weight: (C_out, C_in, 1, 1)   (PyTorch conv weight layout)
    bias:   (C_out,)
    returns (N, C_out, H, W)
    """
    N, C_in, H, W = x_nchw.shape
    C_out = weight.shape[0]
    HW = H * W
    dsize = jnp.dtype(x_nchw.dtype).itemsize

    r0 = pl.cdiv(HW, 128)
    ts, r_pad = _pick_row_tile(r0, N, C_in + C_out, dsize)
    hw_pad = r_pad * 128

    x3 = x_nchw.reshape(N, C_in, HW)              # free reshape (channels-first)
    if hw_pad != HW:
        # Pad spatial axis so every tile stays lane-dense (multiple of 128).
        x3 = jnp.pad(x3, ((0, 0), (0, 0), (0, hw_pad - HW)))
    x4 = x3.reshape(N, C_in, r_pad, 128)          # free reshape

    # Weights/bias live in SMEM as f32 scalars; they are cast to the input
    # dtype inside the kernel so bf16 inputs compute in bf16 (v6e/v7x VALU).
    w2 = weight.reshape(C_out, C_in).astype(jnp.float32)
    b1 = bias.astype(jnp.float32)

    out4 = outconv_pallas(x4, w2, b1, ts=ts)      # (N, C_out, r_pad, 128)
    out3 = out4.reshape(N, C_out, hw_pad)
    if hw_pad != HW:
        out3 = out3[:, :, :HW]
    return out3.reshape(N, C_out, H, W)           # free reshape back to NCHW


if __name__ == "__main__":
    key = jax.random.PRNGKey(0)
    k_x, k_w, k_b, k_x2 = jax.random.split(key, 4)

    N, C_in, H, W = 2, 4, 16, 16
    C_out = 3

    x = jax.random.normal(k_x, (N, C_in, H, W), dtype=jnp.float32)

    # Deterministic synthetic parameters (same shapes as nn.Conv2d(C_in, C_out, 1))
    fan_in = C_in  # kernel_size=1
    bound = 1.0 / (fan_in ** 0.5)
    weight = jax.random.uniform(k_w, (C_out, C_in, 1, 1), jnp.float32, -bound, bound)
    bias = jax.random.uniform(k_b, (C_out,), jnp.float32, -bound, bound)

    out = out_conv_forward(x, weight, bias)
    out = jax.block_until_ready(out)

    ref = jnp.einsum("nchw,oc->nohw", x, weight.reshape(C_out, C_in)) \
        + bias[None, :, None, None]
    assert out.shape == (N, C_out, H, W)
    assert jnp.allclose(out, ref, atol=1e-5), "mismatch vs reference"

    # Exercise the padded (HW % 128 != 0) path as well.
    H2, W2 = 10, 10
    x2 = jax.random.normal(k_x2, (N, C_in, H2, W2), dtype=jnp.float32)
    out2 = jax.block_until_ready(out_conv_forward(x2, weight, bias))
    ref2 = jnp.einsum("nchw,oc->nohw", x2, weight.reshape(C_out, C_in)) \
        + bias[None, :, None, None]
    assert out2.shape == (N, C_out, H2, W2)
    assert jnp.allclose(out2, ref2, atol=1e-5), "mismatch vs reference (padded path)"

    print("KERNEL_OK")
</pallas_src>

<mosaic_0001>
module attributes {stable_mosaic.version = 11 : i64} {
  func.func @kernel(%arg0: i32, %arg1: i32, %arg2: memref<1x4x2x128xf32, #tpu.memory_space<vmem>>, %arg3: memref<3x4xf32, #tpu.memory_space<smem>>, %arg4: memref<3xf32, #tpu.memory_space<smem>>, %arg5: memref<1x3x2x128xf32, #tpu.memory_space<vmem>>) attributes {dimension_semantics = [#tpu.dimension_semantics<parallel>, #tpu.dimension_semantics<parallel>], iteration_bounds = array<i64: 2, 1>, scalar_prefetch = 0 : i64, scratch_operands = 0 : i64, tpu.core_type = #tpu.core_type<tc>, window_params = [{transform_indices = @transform_0, window_bounds = array<i64: 1, 4, 2, 128>}, {transform_indices = @transform_1, window_bounds = array<i64: 3, 4>}, {transform_indices = @transform_2, window_bounds = array<i64: 3>}, {transform_indices = @transform_3, window_bounds = array<i64: 1, 3, 2, 128>}]} {
    %c0 = arith.constant 0 : index
    %c0_0 = arith.constant 0 : index
    %c0_1 = arith.constant 0 : index
    %c0_2 = arith.constant 0 : index
    %0 = vector.load %arg2[%c0, %c0_0, %c0_1, %c0_2] : memref<1x4x2x128xf32, #tpu.memory_space<vmem>>, vector<1x1x2x128xf32>
    %1 = vector.shape_cast %0 : vector<1x1x2x128xf32> to vector<2x128xf32>
    %c0_3 = arith.constant 0 : index
    %c0_4 = arith.constant 0 : index
    %2 = memref.load %arg3[%c0_3, %c0_4] : memref<3x4xf32, #tpu.memory_space<smem>>
    %3 = vector.broadcast %2 : f32 to vector<2x128xf32>
    %4 = arith.mulf %1, %3 : vector<2x128xf32>
    %c0_5 = arith.constant 0 : index
    %5 = memref.load %arg4[%c0_5] : memref<3xf32, #tpu.memory_space<smem>>
    %6 = vector.broadcast %5 : f32 to vector<2x128xf32>
    %7 = arith.addf %4, %6 : vector<2x128xf32>
    %c0_6 = arith.constant 0 : index
    %c1 = arith.constant 1 : index
    %c0_7 = arith.constant 0 : index
    %c0_8 = arith.constant 0 : index
    %8 = vector.load %arg2[%c0_6, %c1, %c0_7, %c0_8] : memref<1x4x2x128xf32, #tpu.memory_space<vmem>>, vector<1x1x2x128xf32>
    %9 = vector.shape_cast %8 : vector<1x1x2x128xf32> to vector<2x128xf32>
    %c0_9 = arith.constant 0 : index
    %c1_10 = arith.constant 1 : index
    %10 = memref.load %arg3[%c0_9, %c1_10] : memref<3x4xf32, #tpu.memory_space<smem>>
    %11 = vector.broadcast %10 : f32 to vector<2x128xf32>
    %12 = arith.mulf %9, %11 : vector<2x128xf32>
    %13 = arith.addf %7, %12 : vector<2x128xf32>
    %c0_11 = arith.constant 0 : index
    %c2 = arith.constant 2 : index
    %c0_12 = arith.constant 0 : index
    %c0_13 = arith.constant 0 : index
    %14 = vector.load %arg2[%c0_11, %c2, %c0_12, %c0_13] : memref<1x4x2x128xf32, #tpu.memory_space<vmem>>, vector<1x1x2x128xf32>
    %15 = vector.shape_cast %14 : vector<1x1x2x128xf32> to vector<2x128xf32>
    %c0_14 = arith.constant 0 : index
    %c2_15 = arith.constant 2 : index
    %16 = memref.load %arg3[%c0_14, %c2_15] : memref<3x4xf32, #tpu.memory_space<smem>>
    %17 = vector.broadcast %16 : f32 to vector<2x128xf32>
    %18 = arith.mulf %15, %17 : vector<2x128xf32>
    %19 = arith.addf %13, %18 : vector<2x128xf32>
    %c0_16 = arith.constant 0 : index
    %c3 = arith.constant 3 : index
    %c0_17 = arith.constant 0 : index
    %c0_18 = arith.constant 0 : index
    %20 = vector.load %arg2[%c0_16, %c3, %c0_17, %c0_18] : memref<1x4x2x128xf32, #tpu.memory_space<vmem>>, vector<1x1x2x128xf32>
    %21 = vector.shape_cast %20 : vector<1x1x2x128xf32> to vector<2x128xf32>
    %c0_19 = arith.constant 0 : index
    %c3_20 = arith.constant 3 : index
    %22 = memref.load %arg3[%c0_19, %c3_20] : memref<3x4xf32, #tpu.memory_space<smem>>
    %23 = vector.broadcast %22 : f32 to vector<2x128xf32>
    %24 = arith.mulf %21, %23 : vector<2x128xf32>
    %25 = arith.addf %19, %24 : vector<2x128xf32>
    %c0_21 = arith.constant 0 : index
    %c0_22 = arith.constant 0 : index
    %c0_23 = arith.constant 0 : index
    %c0_24 = arith.constant 0 : index
    %26 = vector.load %arg5[%c0_21, %c0_22, %c0_23, %c0_24] : memref<1x3x2x128xf32, #tpu.memory_space<vmem>>, vector<1x1x2x128xf32>
    %27 = vector.shape_cast %26 : vector<1x1x2x128xf32> to vector<2x128xf32>
    %28 = vector.shape_cast %25 : vector<2x128xf32> to vector<1x1x2x128xf32>
    tpu.vector_store %arg5[%c0_21, %c0_22, %c0_23, %c0_24], %28 {strides = array<i32>} : memref<1x3x2x128xf32, #tpu.memory_space<vmem>>, vector<1x1x2x128xf32>,
    %c0_25 = arith.constant 0 : index
    %c0_26 = arith.constant 0 : index
    %c0_27 = arith.constant 0 : index
    %c0_28 = arith.constant 0 : index
    %29 = vector.load %arg2[%c0_25, %c0_26, %c0_27, %c0_28] : memref<1x4x2x128xf32, #tpu.memory_space<vmem>>, vector<1x1x2x128xf32>
    %30 = vector.shape_cast %29 : vector<1x1x2x128xf32> to vector<2x128xf32>
    %c1_29 = arith.constant 1 : index
    %c0_30 = arith.constant 0 : index
    %31 = memref.load %arg3[%c1_29, %c0_30] : memref<3x4xf32, #tpu.memory_space<smem>>
    %32 = vector.broadcast %31 : f32 to vector<2x128xf32>
    %33 = arith.mulf %30, %32 : vector<2x128xf32>
    %c1_31 = arith.constant 1 : index
    %34 = memref.load %arg4[%c1_31] : memref<3xf32, #tpu.memory_space<smem>>
    %35 = vector.broadcast %34 : f32 to vector<2x128xf32>
    %36 = arith.addf %33, %35 : vector<2x128xf32>
    %c0_32 = arith.constant 0 : index
    %c1_33 = arith.constant 1 : index
    %c0_34 = arith.constant 0 : index
    %c0_35 = arith.constant 0 : index
    %37 = vector.load %arg2[%c0_32, %c1_33, %c0_34, %c0_35] : memref<1x4x2x128xf32, #tpu.memory_space<vmem>>, vector<1x1x2x128xf32>
    %38 = vector.shape_cast %37 : vector<1x1x2x128xf32> to vector<2x128xf32>
    %c1_36 = arith.constant 1 : index
    %c1_37 = arith.constant 1 : index
    %39 = memref.load %arg3[%c1_36, %c1_37] : memref<3x4xf32, #tpu.memory_space<smem>>
    %40 = vector.broadcast %39 : f32 to vector<2x128xf32>
    %41 = arith.mulf %38, %40 : vector<2x128xf32>
    %42 = arith.addf %36, %41 : vector<2x128xf32>
    %c0_38 = arith.constant 0 : index
    %c2_39 = arith.constant 2 : index
    %c0_40 = arith.constant 0 : index
    %c0_41 = arith.constant 0 : index
    %43 = vector.load %arg2[%c0_38, %c2_39, %c0_40, %c0_41] : memref<1x4x2x128xf32, #tpu.memory_space<vmem>>, vector<1x1x2x128xf32>
    %44 = vector.shape_cast %43 : vector<1x1x2x128xf32> to vector<2x128xf32>
    %c1_42 = arith.constant 1 : index
    %c2_43 = arith.constant 2 : index
    %45 = memref.load %arg3[%c1_42, %c2_43] : memref<3x4xf32, #tpu.memory_space<smem>>
    %46 = vector.broadcast %45 : f32 to vector<2x128xf32>
    %47 = arith.mulf %44, %46 : vector<2x128xf32>
    %48 = arith.addf %42, %47 : vector<2x128xf32>
    %c0_44 = arith.constant 0 : index
    %c3_45 = arith.constant 3 : index
    %c0_46 = arith.constant 0 : index
    %c0_47 = arith.constant 0 : index
    %49 = vector.load %arg2[%c0_44, %c3_45, %c0_46, %c0_47] : memref<1x4x2x128xf32, #tpu.memory_space<vmem>>, vector<1x1x2x128xf32>
    %50 = vector.shape_cast %49 : vector<1x1x2x128xf32> to vector<2x128xf32>
    %c1_48 = arith.constant 1 : index
    %c3_49 = arith.constant 3 : index
    %51 = memref.load %arg3[%c1_48, %c3_49] : memref<3x4xf32, #tpu.memory_space<smem>>
    %52 = vector.broadcast %51 : f32 to vector<2x128xf32>
    %53 = arith.mulf %50, %52 : vector<2x128xf32>
    %54 = arith.addf %48, %53 : vector<2x128xf32>
    %c0_50 = arith.constant 0 : index
    %c1_51 = arith.constant 1 : index
    %c0_52 = arith.constant 0 : index
    %c0_53 = arith.constant 0 : index
    %55 = vector.load %arg5[%c0_50, %c1_51, %c0_52, %c0_53] : memref<1x3x2x128xf32, #tpu.memory_space<vmem>>, vector<1x1x2x128xf32>
    %56 = vector.shape_cast %55 : vector<1x1x2x128xf32> to vector<2x128xf32>
    %57 = vector.shape_cast %54 : vector<2x128xf32> to vector<1x1x2x128xf32>
    tpu.vector_store %arg5[%c0_50, %c1_51, %c0_52, %c0_53], %57 {strides = array<i32>} : memref<1x3x2x128xf32, #tpu.memory_space<vmem>>, vector<1x1x2x128xf32>,
    %c0_54 = arith.constant 0 : index
    %c0_55 = arith.constant 0 : index
    %c0_56 = arith.constant 0 : index
    %c0_57 = arith.constant 0 : index
    %58 = vector.load %arg2[%c0_54, %c0_55, %c0_56, %c0_57] : memref<1x4x2x128xf32, #tpu.memory_space<vmem>>, vector<1x1x2x128xf32>
    %59 = vector.shape_cast %58 : vector<1x1x2x128xf32> to vector<2x128xf32>
    %c2_58 = arith.constant 2 : index
    %c0_59 = arith.constant 0 : index
    %60 = memref.load %arg3[%c2_58, %c0_59] : memref<3x4xf32, #tpu.memory_space<smem>>
    %61 = vector.broadcast %60 : f32 to vector<2x128xf32>
    %62 = arith.mulf %59, %61 : vector<2x128xf32>
    %c2_60 = arith.constant 2 : index
    %63 = memref.load %arg4[%c2_60] : memref<3xf32, #tpu.memory_space<smem>>
    %64 = vector.broadcast %63 : f32 to vector<2x128xf32>
    %65 = arith.addf %62, %64 : vector<2x128xf32>
    %c0_61 = arith.constant 0 : index
    %c1_62 = arith.constant 1 : index
    %c0_63 = arith.constant 0 : index
    %c0_64 = arith.constant 0 : index
    %66 = vector.load %arg2[%c0_61, %c1_62, %c0_63, %c0_64] : memref<1x4x2x128xf32, #tpu.memory_space<vmem>>, vector<1x1x2x128xf32>
    %67 = vector.shape_cast %66 : vector<1x1x2x128xf32> to vector<2x128xf32>
    %c2_65 = arith.constant 2 : index
    %c1_66 = arith.constant 1 : index
    %68 = memref.load %arg3[%c2_65, %c1_66] : memref<3x4xf32, #tpu.memory_space<smem>>
    %69 = vector.broadcast %68 : f32 to vector<2x128xf32>
    %70 = arith.mulf %67, %69 : vector<2x128xf32>
    %71 = arith.addf %65, %70 : vector<2x128xf32>
    %c0_67 = arith.constant 0 : index
    %c2_68 = arith.constant 2 : index
    %c0_69 = arith.constant 0 : index
    %c0_70 = arith.constant 0 : index
    %72 = vector.load %arg2[%c0_67, %c2_68, %c0_69, %c0_70] : memref<1x4x2x128xf32, #tpu.memory_space<vmem>>, vector<1x1x2x128xf32>
    %73 = vector.shape_cast %72 : vector<1x1x2x128xf32> to vector<2x128xf32>
    %c2_71 = arith.constant 2 : index
    %c2_72 = arith.constant 2 : index
    %74 = memref.load %arg3[%c2_71, %c2_72] : memref<3x4xf32, #tpu.memory_space<smem>>
    %75 = vector.broadcast %74 : f32 to vector<2x128xf32>
    %76 = arith.mulf %73, %75 : vector<2x128xf32>
    %77 = arith.addf %71, %76 : vector<2x128xf32>
    %c0_73 = arith.constant 0 : index
    %c3_74 = arith.constant 3 : index
    %c0_75 = arith.constant 0 : index
    %c0_76 = arith.constant 0 : index
    %78 = vector.load %arg2[%c0_73, %c3_74, %c0_75, %c0_76] : memref<1x4x2x128xf32, #tpu.memory_space<vmem>>, vector<1x1x2x128xf32>
    %79 = vector.shape_cast %78 : vector<1x1x2x128xf32> to vector<2x128xf32>
    %c2_77 = arith.constant 2 : index
    %c3_78 = arith.constant 3 : index
    %80 = memref.load %arg3[%c2_77, %c3_78] : memref<3x4xf32, #tpu.memory_space<smem>>
    %81 = vector.broadcast %80 : f32 to vector<2x128xf32>
    %82 = arith.mulf %79, %81 : vector<2x128xf32>
    %83 = arith.addf %77, %82 : vector<2x128xf32>
    %c0_79 = arith.constant 0 : index
    %c2_80 = arith.constant 2 : index
    %c0_81 = arith.constant 0 : index
    %c0_82 = arith.constant 0 : index
    %84 = vector.load %arg5[%c0_79, %c2_80, %c0_81, %c0_82] : memref<1x3x2x128xf32, #tpu.memory_space<vmem>>, vector<1x1x2x128xf32>
    %85 = vector.shape_cast %84 : vector<1x1x2x128xf32> to vector<2x128xf32>
    %86 = vector.shape_cast %83 : vector<2x128xf32> to vector<1x1x2x128xf32>
    tpu.vector_store %arg5[%c0_79, %c2_80, %c0_81, %c0_82], %86 {strides = array<i32>} : memref<1x3x2x128xf32, #tpu.memory_space<vmem>>, vector<1x1x2x128xf32>,
    return
  }
  func.func @transform_0(%arg0: i32, %arg1: i32) -> (i32, i32, i32, i32) {
    %c0_i32 = arith.constant 0 : i32
    %c0_i32_0 = arith.constant 0 : i32
    %c0_i32_1 = arith.constant 0 : i32
    return %arg0, %c0_i32, %arg1, %c0_i32_0 : i32, i32, i32, i32
  }
  func.func @transform_1(%arg0: i32, %arg1: i32) -> (i32, i32) {
    %c0_i32 = arith.constant 0 : i32
    %c0_i32_0 = arith.constant 0 : i32
    %c0_i32_1 = arith.constant 0 : i32
    return %c0_i32, %c0_i32_0 : i32, i32
  }
  func.func @transform_2(%arg0: i32, %arg1: i32) -> i32 {
    %c0_i32 = arith.constant 0 : i32
    %c0_i32_0 = arith.constant 0 : i32
    return %c0_i32 : i32
  }
  func.func @transform_3(%arg0: i32, %arg1: i32) -> (i32, i32, i32, i32) {
    %c0_i32 = arith.constant 0 : i32
    %c0_i32_0 = arith.constant 0 : i32
    %c0_i32_1 = arith.constant 0 : i32
    return %arg0, %c0_i32, %arg1, %c0_i32_0 : i32, i32, i32, i32
  }
}

</mosaic_0001>

<llo_original>
// kernel: tpu_custom_call.1
$region0: #{tpu_custom_call.1}
  #allocation0 [shape = 'u32[]', space=smem, size = 0x4, offset = 0x4, fixed_abs, tag = 'smem constant byte address 0x4 - core index']
  #allocation1 [shape = 'u32[144,128]{1,0:T(1,128)}', space=vmem, size = 0x12000, scoped, tag = 'internal scratch']
  %s0 = inlined_call_operand.hbm [shape: f32[2,4,2,128], index: 0, kind: input, shape index: {}]
  %s1 = inlined_call_operand.hbm [shape: f32[3,4], index: 1, kind: input, shape index: {}]
  %s2 = inlined_call_operand.vmem [shape: f32[3], index: 2, kind: input, shape index: {}]
  %s3 = inlined_call_operand.hbm [shape: f32[2,3,2,128], index: 3, kind: output, shape index: {}]
  %s4 = sld [smem:[#allocation0]]
  $region57: #{tpu_custom_call.1} parent=0
    _
  %s6 = ssub.s32 1, %s4
  %s7 = scalar_select 0, %s6, %s4
  $region1: #{tpu_custom_call.1} parent=0
    #allocation2 [shape = 'u8[8192]{0}', space=vmem, size = 0x2000, scoped, tag = 'input window, operand 0']
    #allocation3 [shape = 's32[2]{0}', space=sflag, size = 0x8, scoped, tag = 'scoped memory for tpu_custom_call.1']
    #allocation4 [shape = 's32[2]{0}', space=sflag, size = 0x8, scoped, tag = 'scoped memory for tpu_custom_call.1']
    #allocation5 [shape = 's32[2]{0}', space=sflag, size = 0x8, scoped, tag = 'scoped memory for tpu_custom_call.1']
    #allocation6 [shape = 's32[2]{0}', space=sflag, size = 0x8, scoped, tag = 'scoped memory for tpu_custom_call.1']
    #allocation7 [shape = 'u8[2048]{0}', space=smem, size = 0x800, scoped, tag = 'input window, operand 1, single buffered']
    #allocation8 [shape = 'u8[512]{0}', space=smem, size = 0x200, scoped, tag = 'input window, operand 2, single buffered']
    #allocation9 [shape = 'u8[6144]{0}', space=vmem, size = 0x1800, scoped, tag = 'output window, operand 0']
    %8 = vsyncpa [#allocation3], 0
    %s9 = scalar_lea.sflag [#allocation3], 1
    %10 = vsyncpa %s9, 0
    %11 = vsyncpa [#allocation5], 0
    %12 = vsyncpa [#allocation6], 0
    %13 = vsyncpa [#allocation4], 0
    %s14 = scalar_lea.sflag [#allocation4], 1
    %15 = vsyncpa %s14, 0
    loop: start=0, step=1, limit=4
    $region2: #{tpu_custom_call.1} parent=1 // loop_pre_header
      _
    $region3: #{tpu_custom_call.1} parent=1 // loop_header
      %s17 = sphi 0, %s21
      %p18 = scmp.ge.s32.totalorder %s17, 4
      %s24 = sphi 0, %s36
      %s25 = sphi 0, %s32
      %s26 = sphi 0, %s24
      %s27 = sphi 0, %s25
      %s28 = sphi 0, %s26
      %s29 = sphi 0, %s27
      %s41 = sphi 0, %s43
      %s44 = sphi 0, %s41
      %s45 = sphi 0, %s44
      %s61 = sphi 0, %s45
      %s65 = sphi 0, %s65
      %s67 = sphi 0, %s65
      %s68 = sphi 0, %s67
      %s82 = sphi 0, %s68
      %s86 = sphi 0, %s86
      %s88 = sphi 0, %s86
      %s89 = sphi 0, %s88
      %s103 = sphi 0, %s89
      %s111 = sphi 0, %s113
      %s114 = sphi 0, %s111
      %s115 = sphi 0, %s114
      %s131 = sphi 0, %s115
    $region4: #{tpu_custom_call.1} parent=1 // loop_header_branch
      %20 = sbr.rel (%p18) target = $region8
    $region5: #{tpu_custom_call.1} parent=1 // loop_body
      %s22 = ssub.s32 %s17, 1
      %s23 = ssub.s32 %s17, 2
      %s30 = sadd.s32 1, %s25
      %p31 = scmp.ge.s32.totalorder %s30, 1
      %s32 = scalar_select %p31, 0, %s30
      %s33 = sadd.s32 1, %s24
      %s34 = scalar_select %p31, %s33, %s24
      %p35 = scmp.ge.s32.totalorder %s34, 2
      %s36 = scalar_select %p35, 0, %s34
      %s37 = ssub.s32 %s24, %s36
      %s38 = ssub.s32 %s25, %s32
      %s39 = sor.u32 %s37, %s38
      %p40 = scmp.eq.s32.totalorder %s39, 0
      %s42 = sadd.s32 %s41, 1
      %s43 = scalar_select %p40, %s41, %s42
      %p46 = pneg %p40
      %p47 = scmp.eq.s32.totalorder %s17, 1
      %p48 = por %p46, %p47
      %p49 = scmp.ne.s32.totalorder %s41, %s44
      %p50 = scmp.eq.s32.totalorder %s17, 0
      %p51 = por %p49, %p50
      %p52 = scmp.ne.s32.totalorder %s41, %s44
      %p53 = scmp.eq.s32.totalorder %s22, 1
      %p54 = por %p52, %p53
      %p55 = scmp.ne.s32.totalorder %s44, %s45
      %p56 = scmp.eq.s32.totalorder %s22, 0
      %p57 = por %p55, %p56
      %p58 = scmp.ne.s32.totalorder %s44, %s45
      %p59 = scmp.eq.s32.totalorder %s23, 1
      %p60 = por %p58, %p59
      %p62 = scmp.ne.s32.totalorder %s45, %s61
      %p63 = scmp.eq.s32.totalorder %s23, 0
      %p64 = por %p62, %p63
      %s66 = sadd.s32 %s65, 1
      %p69 = scmp.eq.s32.totalorder %s17, 1
      %p70 = scmp.ne.s32.totalorder %s65, %s67
      %p71 = scmp.eq.s32.totalorder %s17, 0
      %p72 = por %p70, %p71
      %p73 = scmp.ne.s32.totalorder %s65, %s67
      %p74 = scmp.eq.s32.totalorder %s22, 1
      %p75 = por %p73, %p74
      %p76 = scmp.ne.s32.totalorder %s67, %s68
      %p77 = scmp.eq.s32.totalorder %s22, 0
      %p78 = por %p76, %p77
      %p79 = scmp.ne.s32.totalorder %s67, %s68
      %p80 = scmp.eq.s32.totalorder %s23, 1
      %p81 = por %p79, %p80
      %p83 = scmp.ne.s32.totalorder %s68, %s82
      %p84 = scmp.eq.s32.totalorder %s23, 0
      %p85 = por %p83, %p84
      %s87 = sadd.s32 %s86, 1
      %p90 = scmp.eq.s32.totalorder %s17, 1
      %p91 = scmp.ne.s32.totalorder %s86, %s88
      %p92 = scmp.eq.s32.totalorder %s17, 0
      %p93 = por %p91, %p92
      %p94 = scmp.ne.s32.totalorder %s86, %s88
      %p95 = scmp.eq.s32.totalorder %s22, 1
      %p96 = por %p94, %p95
      %p97 = scmp.ne.s32.totalorder %s88, %s89
      %p98 = scmp.eq.s32.totalorder %s22, 0
      %p99 = por %p97, %p98
      %p100 = scmp.ne.s32.totalorder %s88, %s89
      %p101 = scmp.eq.s32.totalorder %s23, 1
      %p102 = por %p100, %p101
      %p104 = scmp.ne.s32.totalorder %s89, %s103
      %p105 = scmp.eq.s32.totalorder %s23, 0
      %p106 = por %p104, %p105
      %s107 = ssub.s32 %s24, %s36
      %s108 = ssub.s32 %s25, %s32
      %s109 = sor.u32 %s107, %s108
      %p110 = scmp.eq.s32.totalorder %s109, 0
      %s112 = sadd.s32 %s111, 1
      %s113 = scalar_select %p110, %s111, %s112
      %p116 = pneg %p110
      %p117 = scmp.eq.s32.totalorder %s17, 1
      %p118 = por %p116, %p117
      %p119 = scmp.ne.s32.totalorder %s111, %s114
      %p120 = scmp.eq.s32.totalorder %s17, 0
      %p121 = por %p119, %p120
      %p122 = scmp.ne.s32.totalorder %s111, %s114
      %p123 = scmp.eq.s32.totalorder %s22, 1
      %p124 = por %p122, %p123
      %p125 = scmp.ne.s32.totalorder %s114, %s115
      %p126 = scmp.eq.s32.totalorder %s22, 0
      %p127 = por %p125, %p126
      %p128 = scmp.ne.s32.totalorder %s114, %s115
      %p129 = scmp.eq.s32.totalorder %s23, 1
      %p130 = por %p128, %p129
      %p132 = scmp.ne.s32.totalorder %s115, %s131
      %p133 = scmp.eq.s32.totalorder %s23, 0
      %p134 = por %p132, %p133
      %p135 = scmp.le.s32.totalorder 1, %s17
      %p136 = scmp.lt.s32.totalorder %s17, 3
      %p137 = pnand %p135, %p136
      %p138 = pneg %p137
      // Predicated region
      $region9: #{tpu_custom_call.1} parent=5 // pred_check
        _
      $region10: #{tpu_custom_call.1} parent=5 // pred_check_branch
        %140 = sbr.rel (%p137) target = $region12
      $region11: #{tpu_custom_call.1} parent=5 // pred_region
        %s141 = ssub.s32 %s17, 1
        // Predicated region
        $region13: #{tpu_custom_call.1} parent=11 // pred_check
          %p142 = pneg %p78
        $region14: #{tpu_custom_call.1} parent=11 // pred_check_branch
          %144 = sbr.rel (%p142) target = $region16
        $region15: #{tpu_custom_call.1} parent=11 // pred_region
          %s146 = ssub.s32 64, 64
          %147 = vsyncadd [#allocation5], %s146
          %150 = dma.hbm_to_smem %s1, 64, [#allocation7], [#allocation5]
        $region16: #{tpu_custom_call.1} parent=11 // pred_fallthru
          _
        // Predicated region
        $region17: #{tpu_custom_call.1} parent=11 // pred_check
          %p151 = pneg %p99
        $region18: #{tpu_custom_call.1} parent=11 // pred_check_branch
          %153 = sbr.rel (%p151) target = $region20
        $region19: #{tpu_custom_call.1} parent=11 // pred_region
          %s155 = ssub.s32 16, 16
          %156 = vsyncadd [#allocation6], %s155
          %s158 = sshll.u32 %s2, 4
          %s159 = int_to_ptr.vmem [resolvable:$true] %s158
          %161 = dma.vmem_to_smem %s159, 16, [#allocation8], [#allocation6]
        $region20: #{tpu_custom_call.1} parent=11 // pred_fallthru
          _
      $region12: #{tpu_custom_call.1} parent=5 // pred_fallthru
        _
      %p162 = scmp.lt.s32.totalorder %s17, 2
      // Predicated region
      $region21: #{tpu_custom_call.1} parent=5 // pred_check
        %p163 = pneg %p162
      $region22: #{tpu_custom_call.1} parent=5 // pred_check_branch
        %165 = sbr.rel (%p163) target = $region24
      $region23: #{tpu_custom_call.1} parent=5 // pred_region
        // Predicated region
        $region25: #{tpu_custom_call.1} parent=23 // pred_check
          %p166 = pneg %p51
        $region26: #{tpu_custom_call.1} parent=23 // pred_check_branch
          %168 = sbr.rel (%p166) target = $region28
        $region27: #{tpu_custom_call.1} parent=23 // pred_region
          %s169 = sand.u32 %s41, 1
          %s170 = scalar_lea.sflag [#allocation3], %s169
          %s171 = sand.u32 %s41, 1
          %s172 = smul.addr %s171, 8
          %s173 = scalar_lea.vmem [#allocation2], %s172
          %s175 = ssub.s32 128, 128
          %176 = vsyncadd %s170, %s175
          %s177 = smul.addr %s24, 4
          %s178 = sadd.s32 %s25, %s177
          %s179 = smul.addr %s178, 32
          %s180 = scalar_lea.hbm %s0, %s179
          %s181 = sshll.u32 %s173, 4
          %s182 = int_to_ptr.vmem [resolvable:$true] %s181
          %187 = dma.hbm_to_vmem [thread:$0]  %s180, 128, %s182, %s170, 32, 32, 2
        $region28: #{tpu_custom_call.1} parent=23 // pred_fallthru
          _
      $region24: #{tpu_custom_call.1} parent=5 // pred_fallthru
        _
      %p188 = scmp.le.s32.totalorder 1, %s17
      %p189 = scmp.lt.s32.totalorder %s17, 3
      %p190 = pnand %p188, %p189
      %p191 = pneg %p190
      // Predicated region
      $region29: #{tpu_custom_call.1} parent=5 // pred_check
        _
      $region30: #{tpu_custom_call.1} parent=5 // pred_check_branch
        %193 = sbr.rel (%p190) target = $region32
      $region31: #{tpu_custom_call.1} parent=5 // pred_region
        %s194 = ssub.s32 %s17, 1
        %s195 = sand.u32 %s44, 1
        %s196 = scalar_lea.sflag [#allocation3], %s195
        %s197 = sand.u32 %s44, 1
        %s198 = smul.addr %s197, 8
        %s199 = scalar_lea.vmem [#allocation2], %s198
        // Predicated region
        $region33: #{tpu_custom_call.1} parent=31 // pred_check
          %p200 = pneg %p57
        $region34: #{tpu_custom_call.1} parent=31 // pred_check_branch
          %202 = sbr.rel (%p200) target = $region36
        $region35: #{tpu_custom_call.1} parent=31 // pred_region
          %203 = dma.done %s196, 128
        $region36: #{tpu_custom_call.1} parent=31 // pred_fallthru
          _
        // Predicated region
        $region37: #{tpu_custom_call.1} parent=31 // pred_check
          %p204 = pneg %p78
        $region38: #{tpu_custom_call.1} parent=31 // pred_check_branch
          %206 = sbr.rel (%p204) target = $region40
        $region39: #{tpu_custom_call.1} parent=31 // pred_region
          %207 = dma.done [#allocation5], 64
        $region40: #{tpu_custom_call.1} parent=31 // pred_fallthru
          _
        // Predicated region
        $region41: #{tpu_custom_call.1} parent=31 // pred_check
          %p208 = pneg %p99
        $region42: #{tpu_custom_call.1} parent=31 // pred_check_branch
          %210 = sbr.rel (%p208) target = $region44
        $region43: #{tpu_custom_call.1} parent=31 // pred_region
          %211 = dma.done [#allocation6], 16
        $region44: #{tpu_custom_call.1} parent=31 // pred_fallthru
          _
        %212 = sfence
        %s213 = sand.u32 %s44, 1
        %s214 = scalar_lea.sflag [#allocation3], %s213
        %s215 = sand.u32 %s44, 1
        %s216 = smul.addr %s215, 8
        %s217 = scalar_lea.vmem [#allocation2], %s216
        %p218 = pneg %p57
        %p219 = pneg %p54
        %p220 = pneg %p78
        %p221 = pneg %p75
        %p222 = pneg %p99
        %p223 = pneg %p96
        %p224 = pneg %p127
        %p225 = pneg %p124
        %s226 = sand.u32 %s114, 1
        %s227 = scalar_lea.sflag [#allocation4], %s226
        %s228 = sand.u32 %s114, 1
        %s229 = smul.addr %s228, 6
        %s230 = scalar_lea.vmem [#allocation9], %s229
        %v231 = vld [vmem:[%s199] sm:$0x3]
        %s232 = sld [smem:[#allocation7]]
        %v233 = vstv %s232
        %v234 = vmul.f32 %v231, %v233
        %s235 = sld [smem:[#allocation8]]
        %v236 = vstv %s235
        %v237 = vadd.f32 %v234, %v236
        %s238 = scalar_lea.vmem %s199, 2 [#allocation2]
        %v239 = vld [vmem:[%s238] sm:$0x3]
        %s240 = sld [smem:[#allocation7 + $0x1]]
        %v241 = vstv %s240
        %v242 = vmul.f32 %v239, %v241
        %v243 = vadd.f32 %v237, %v242
        %s244 = scalar_lea.vmem %s199, 4 [#allocation2]
        %v245 = vld [vmem:[%s244] sm:$0x3]
        %s246 = sld [smem:[#allocation7 + $0x2]]
        %v247 = vstv %s246
        %v248 = vmul.f32 %v245, %v247
        %v249 = vadd.f32 %v243, %v248
        %s250 = scalar_lea.vmem %s199, 6 [#allocation2]
        %v251 = vld [vmem:[%s250] sm:$0x3]
        %s252 = sld [smem:[#allocation7 + $0x3]]
        %v253 = vstv %s252
        %v254 = vmul.f32 %v251, %v253
        %v255 = vadd.f32 %v249, %v254
        %256 = vst [vmem:[%s230] sm:$0x3] %v255
        %v257 = vld [vmem:[%s199] sm:$0x3]
        %s258 = sld [smem:[#allocation7 + $0x80]]
        %v259 = vstv %s258
        %v260 = vmul.f32 %v257, %v259
        %s261 = sld [smem:[#allocation8 + $0x1]]
        %v262 = vstv %s261
        %v263 = vadd.f32 %v260, %v262
        %v264 = vld [vmem:[%s238] sm:$0x3]
        %s265 = sld [smem:[#allocation7 + $0x81]]
        %v266 = vstv %s265
        %v267 = vmul.f32 %v264, %v266
        %v268 = vadd.f32 %v263, %v267
        %v269 = vld [vmem:[%s244] sm:$0x3]
        %s270 = sld [smem:[#allocation7 + $0x82]]
        %v271 = vstv %s270
        %v272 = vmul.f32 %v269, %v271
        %v273 = vadd.f32 %v268, %v272
        %v274 = vld [vmem:[%s250] sm:$0x3]
        %s275 = sld [smem:[#allocation7 + $0x83]]
        %v276 = vstv %s275
        %v277 = vmul.f32 %v274, %v276
        %v278 = vadd.f32 %v273, %v277
        %s279 = scalar_lea.vmem %s230, 2 [#allocation9]
        %280 = vst [vmem:[%s279] sm:$0x3] %v278
        %v281 = vld [vmem:[%s199] sm:$0x3]
        %s282 = sld [smem:[#allocation7 + $0x100]]
        %v283 = vstv %s282
        %v284 = vmul.f32 %v281, %v283
        %s285 = sld [smem:[#allocation8 + $0x2]]
        %v286 = vstv %s285
        %v287 = vadd.f32 %v284, %v286
        %v288 = vld [vmem:[%s238] sm:$0x3]
        %s289 = sld [smem:[#allocation7 + $0x101]]
        %v290 = vstv %s289
        %v291 = vmul.f32 %v288, %v290
        %v292 = vadd.f32 %v287, %v291
        %v293 = vld [vmem:[%s244] sm:$0x3]
        %s294 = sld [smem:[#allocation7 + $0x102]]
        %v295 = vstv %s294
        %v296 = vmul.f32 %v293, %v295
        %v297 = vadd.f32 %v292, %v296
        %v298 = vld [vmem:[%s250] sm:$0x3]
        %s299 = sld [smem:[#allocation7 + $0x103]]
        %v300 = vstv %s299
        %v301 = vmul.f32 %v298, %v300
        %v302 = vadd.f32 %v297, %v301
        %s303 = scalar_lea.vmem %s230, 4 [#allocation9]
        %304 = vst [vmem:[%s303] sm:$0x3] %v302
        %s305 = sand.u32 %s114, 1
        %s306 = scalar_lea.sflag [#allocation4], %s305
        %s307 = sand.u32 %s114, 1
        %s308 = smul.addr %s307, 6
        %s309 = scalar_lea.vmem [#allocation9], %s308
        // Predicated region
        $region45: #{tpu_custom_call.1} parent=31 // pred_check
          %p310 = pneg %p124
        $region46: #{tpu_custom_call.1} parent=31 // pred_check_branch
          %312 = sbr.rel (%p310) target = $region48
        $region47: #{tpu_custom_call.1} parent=31 // pred_region
          %s314 = ssub.s32 96, 96
          %315 = vsyncadd %s306, %s314
          %s316 = smul.addr %s26, 3
          %s317 = sadd.s32 %s27, %s316
          %s318 = smul.addr %s317, 32
          %s319 = scalar_lea.hbm %s3, %s318
          %s320 = sshll.u32 %s309, 4
          %s321 = int_to_ptr.vmem [resolvable:$true] %s320
          %326 = dma.vmem_to_hbm [thread:$0]  %s321, 96, %s319, %s306, 32, 32, 2
        $region48: #{tpu_custom_call.1} parent=31 // pred_fallthru
          _
      $region32: #{tpu_custom_call.1} parent=5 // pred_fallthru
        _
      %p327 = scmp.le.s32.totalorder 2, %s17
      // Predicated region
      $region49: #{tpu_custom_call.1} parent=5 // pred_check
        %p328 = pneg %p327
      $region50: #{tpu_custom_call.1} parent=5 // pred_check_branch
        %330 = sbr.rel (%p328) target = $region52
      $region51: #{tpu_custom_call.1} parent=5 // pred_region
        %s331 = ssub.s32 %s17, 2
        // Predicated region
        $region53: #{tpu_custom_call.1} parent=51 // pred_check
          %p332 = pneg %p130
        $region54: #{tpu_custom_call.1} parent=51 // pred_check_branch
          %334 = sbr.rel (%p332) target = $region56
        $region55: #{tpu_custom_call.1} parent=51 // pred_region
          %s335 = sand.u32 %s115, 1
          %s336 = scalar_lea.sflag [#allocation4], %s335
          %s337 = sand.u32 %s115, 1
          %s338 = smul.addr %s337, 6
          %s339 = scalar_lea.vmem [#allocation9], %s338
          %340 = dma.done %s336, 96
        $region56: #{tpu_custom_call.1} parent=51 // pred_fallthru
          _
      $region52: #{tpu_custom_call.1} parent=5 // pred_fallthru
        _
    $region6: #{tpu_custom_call.1} parent=1 // loop_footer
      %s21 = sadd.s32 1, %s17
    $region7: #{tpu_custom_call.1} parent=1 // loop_footer_branch
      %16 = sbr.rel target = $region3
    $region8: #{tpu_custom_call.1} parent=1 // loop_exit
      _
    %341 = vsyncpa [#allocation3], 1
    %s342 = scalar_lea.sflag [#allocation3], 1
    %343 = vsyncpa %s342, 1
    %344 = vsyncpa [#allocation4], 1
    %s345 = scalar_lea.sflag [#allocation4], 1
    %346 = vsyncpa %s345, 1
    %347 = vsyncpa [#allocation5], 1
    %s348 = scalar_lea.sflag [#allocation5], 1
    %349 = vsyncpa %s348, 1
    %350 = vsyncpa [#allocation6], 1
    %s351 = scalar_lea.sflag [#allocation6], 1
    %352 = vsyncpa %s351, 1

</llo_original>
